<compile_context>
chip_gen: v5e
topology: v5e:2x2
jax: 0.10.0
libtpu: 0.0.40
codegen_flags: <defaults>
</compile_context>

<pallas_src>
import functools
import math

import jax
import jax.numpy as jnp
import numpy as np
from jax.experimental import pallas as pl
from jax.experimental.pallas import tpu as pltpu

LANES = 128
BN_EPS = 1e-5
NC = 2  # leading "parallel" axis for the stats passes: maps to v7x's 2 TensorCores,
        # simply iterates (same math, negligible cost) on single-core v5e/v6e.


def _round_up(n, m):
    return ((n + m - 1) // m) * m


def _vmem_limit_bytes():
    """Generation-aware scoped-VMEM budget: ~75% of physical VMEM, capped."""
    cap = 64 * 1024 * 1024
    try:
        cap = int(getattr(pltpu.get_tpu_info(), "vmem_capacity_bytes", cap)) or cap
    except Exception:
        pass
    return min((cap * 3) // 4, 112 * 1024 * 1024)


def _bn_from_stats(h, ssum, ssq, count, gamma, beta):
    """BatchNorm1d (training mode, biased variance) from per-feature sum / sum-of-squares."""
    # TODO(synk): one-pass E[x^2]-E[x]^2 is cancellation-prone if mean^2 >> var; acceptable here.
    inv_n = 1.0 / float(count)
    mean = ssum * inv_n
    var = jnp.maximum(ssq * inv_n - mean * mean, 0.0)
    return (h - mean) * jax.lax.rsqrt(var + BN_EPS) * gamma + beta


def _mask_pad_rows(h, start, tile, batch):
    row = start + jax.lax.broadcasted_iota(jnp.int32, (tile, 1), 0)
    return jnp.where(row < batch, h, 0.0)


# ---------------------------------------------------------------------------
# Fused single-block kernel: whole batch resident in VMEM -> exact batch stats.
# ---------------------------------------------------------------------------
def _fused_kernel(x_ref,
                  w1_ref, b1_ref, g1_ref, be1_ref,
                  w2_ref, b2_ref, g2_ref, be2_ref,
                  w3_ref, b3_ref,
                  o_ref, *, batch):
    x = x_ref[...]

    h1 = jnp.dot(x, w1_ref[...], preferred_element_type=jnp.float32) + b1_ref[...]
    h1 = jnp.maximum(h1, 0.0)                       # ReLU; dropout -> identity
    s1 = jnp.sum(h1, axis=0, keepdims=True)
    q1 = jnp.sum(h1 * h1, axis=0, keepdims=True)
    h1 = _bn_from_stats(h1, s1, q1, batch, g1_ref[...], be1_ref[...])

    h2 = jnp.dot(h1.astype(w2_ref.dtype), w2_ref[...],
                 preferred_element_type=jnp.float32) + b2_ref[...]
    h2 = jnp.maximum(h2, 0.0)
    s2 = jnp.sum(h2, axis=0, keepdims=True)
    q2 = jnp.sum(h2 * h2, axis=0, keepdims=True)
    h2 = _bn_from_stats(h2, s2, q2, batch, g2_ref[...], be2_ref[...])

    out = jnp.dot(h2.astype(w3_ref.dtype), w3_ref[...],
                  preferred_element_type=jnp.float32) + b3_ref[...]
    o_ref[...] = out.astype(o_ref.dtype)


# ---------------------------------------------------------------------------
# Batch-tiled recompute pipeline (full-batch BN statistics, no activations in HBM).
# ---------------------------------------------------------------------------
def _stats1_kernel(x_ref, w1_ref, b1_ref, s1_ref, q1_ref, *,
                   batch, tile, tiles_per_core, mask_rows):
    c = pl.program_id(0)
    i = pl.program_id(1)

    @pl.when(i == 0)
    def _():
        s1_ref[...] = jnp.zeros_like(s1_ref)
        q1_ref[...] = jnp.zeros_like(q1_ref)

    h = jnp.dot(x_ref[...], w1_ref[...], preferred_element_type=jnp.float32) + b1_ref[...]
    h = jnp.maximum(h, 0.0)
    if mask_rows:  # keep zero-padded batch rows out of the BN statistics
        h = _mask_pad_rows(h, (c * tiles_per_core + i) * tile, tile, batch)
    s1_ref[...] += jnp.sum(h, axis=0, keepdims=True)
    q1_ref[...] += jnp.sum(h * h, axis=0, keepdims=True)


def _stats2_kernel(x_ref, w1_ref, b1_ref, s1p_ref, q1p_ref, g1_ref, be1_ref,
                   w2_ref, b2_ref, s2_ref, q2_ref, *,
                   batch, tile, tiles_per_core, mask_rows):
    c = pl.program_id(0)
    i = pl.program_id(1)

    @pl.when(i == 0)
    def _():
        s2_ref[...] = jnp.zeros_like(s2_ref)
        q2_ref[...] = jnp.zeros_like(q2_ref)

    h1 = jnp.dot(x_ref[...], w1_ref[...], preferred_element_type=jnp.float32) + b1_ref[...]
    h1 = jnp.maximum(h1, 0.0)
    h1 = _bn_from_stats(h1,
                        jnp.sum(s1p_ref[...], axis=0), jnp.sum(q1p_ref[...], axis=0),
                        batch, g1_ref[...], be1_ref[...])

    h2 = jnp.dot(h1.astype(w2_ref.dtype), w2_ref[...],
                 preferred_element_type=jnp.float32) + b2_ref[...]
    h2 = jnp.maximum(h2, 0.0)
    if mask_rows:
        h2 = _mask_pad_rows(h2, (c * tiles_per_core + i) * tile, tile, batch)
    s2_ref[...] += jnp.sum(h2, axis=0, keepdims=True)
    q2_ref[...] += jnp.sum(h2 * h2, axis=0, keepdims=True)


def _out_kernel(x_ref, w1_ref, b1_ref, s1p_ref, q1p_ref, g1_ref, be1_ref,
                w2_ref, b2_ref, s2p_ref, q2p_ref, g2_ref, be2_ref,
                w3_ref, b3_ref, o_ref, *, batch):
    h1 = jnp.dot(x_ref[...], w1_ref[...], preferred_element_type=jnp.float32) + b1_ref[...]
    h1 = jnp.maximum(h1, 0.0)
    h1 = _bn_from_stats(h1,
                        jnp.sum(s1p_ref[...], axis=0), jnp.sum(q1p_ref[...], axis=0),
                        batch, g1_ref[...], be1_ref[...])

    h2 = jnp.dot(h1.astype(w2_ref.dtype), w2_ref[...],
                 preferred_element_type=jnp.float32) + b2_ref[...]
    h2 = jnp.maximum(h2, 0.0)
    h2 = _bn_from_stats(h2,
                        jnp.sum(s2p_ref[...], axis=0), jnp.sum(q2p_ref[...], axis=0),
                        batch, g2_ref[...], be2_ref[...])

    out = jnp.dot(h2.astype(w3_ref.dtype), w3_ref[...],
                  preferred_element_type=jnp.float32) + b3_ref[...]
    o_ref[...] = out.astype(o_ref.dtype)


def binary_classification_forward(x, params, output_dim, *, tile=4096, fused_row_limit=None):
    """Forward pass. `params` from init_params (lane-padded). Returns (B, output_dim) f32."""
    assert tile >= 8 and tile % 8 == 0
    B, in_dim = x.shape
    w1, b1, g1, be1 = params["w1"], params["b1"], params["g1"], params["be1"]
    w2, b2, g2, be2 = params["w2"], params["b2"], params["g2"], params["be2"]
    w3, b3 = params["w3"], params["b3"]
    H1P, H2P, OUTP = w1.shape[1], w2.shape[1], w3.shape[1]
    cdt = w1.dtype
    x = x.astype(cdt)

    vmem_limit = _vmem_limit_bytes()
    if fused_row_limit is None:
        # ~4 KiB per batch row comfortably covers x + both f32 activations + bf16 logits
        # + compiler temporaries: ~12k rows on v7x, ~24k rows on v5e/v6e.
        fused_row_limit = max(8, vmem_limit // 4096)

    def cost(flops, bytes_accessed):
        return pl.CostEstimate(flops=int(flops), transcendentals=0,
                               bytes_accessed=int(bytes_accessed))

    wbytes = sum(int(a.size) * a.dtype.itemsize
                 for a in (w1, b1, g1, be1, w2, b2, g2, be2, w3, b3))

    if B <= fused_row_limit:
        # Whole batch in one VMEM block: exact full-batch BN stats in a single kernel.
        flops = 2 * B * (in_dim * H1P + H1P * H2P + H2P * OUTP)
        nbytes = x.size * x.dtype.itemsize + wbytes + B * OUTP * 2
        vmem = pl.BlockSpec(memory_space=pltpu.MemorySpace.VMEM)
        out = pl.pallas_call(
            functools.partial(_fused_kernel, batch=B),
            out_shape=jax.ShapeDtypeStruct((B, OUTP), cdt),
            in_specs=[vmem] * 11,
            out_specs=vmem,
            compiler_params=pltpu.CompilerParams(vmem_limit_bytes=vmem_limit),
            cost_estimate=cost(flops, nbytes),
        )(x, w1, b1, g1, be1, w2, b2, g2, be2, w3, b3)
        return out[:, :output_dim].astype(jnp.float32)

    # ---- batch-tiled recompute path ----
    chunk = NC * tile
    bp = _round_up(B, chunk)
    if bp != B:
        x = jnp.pad(x, ((0, bp - B), (0, 0)))
    n_tiles = bp // tile
    tpc = n_tiles // NC
    mask_rows = bp != B
    xbytes = bp * in_dim * x.dtype.itemsize

    cp_stats = pltpu.CompilerParams(dimension_semantics=("parallel", "arbitrary"),
                                    vmem_limit_bytes=vmem_limit)
    cp_out = pltpu.CompilerParams(dimension_semantics=("parallel",),
                                  vmem_limit_bytes=vmem_limit)

    # Shared BlockSpecs (2-D grid: core axis c, tile axis i).
    x_spec = pl.BlockSpec((tile, in_dim), lambda c, i: (c * tpc + i, 0))
    w1_spec = pl.BlockSpec((in_dim, H1P), lambda c, i: (0, 0))
    v1_spec = pl.BlockSpec((1, H1P), lambda c, i: (0, 0))
    w2_spec = pl.BlockSpec((H1P, H2P), lambda c, i: (0, 0))
    v2_spec = pl.BlockSpec((1, H2P), lambda c, i: (0, 0))
    s1_in = pl.BlockSpec((NC, 1, H1P), lambda c, i: (0, 0, 0))
    s1_out = pl.BlockSpec((None, 1, H1P), lambda c, i: (c, 0, 0))
    s2_out = pl.BlockSpec((None, 1, H2P), lambda c, i: (c, 0, 0))

    # Pass 1: per-core partial BN1 statistics.
    s1p, q1p = pl.pallas_call(
        functools.partial(_stats1_kernel, batch=B, tile=tile,
                          tiles_per_core=tpc, mask_rows=mask_rows),
        grid=(NC, tpc),
        in_specs=[x_spec, w1_spec, v1_spec],
        out_specs=[s1_out, s1_out],
        out_shape=[jax.ShapeDtypeStruct((NC, 1, H1P), jnp.float32),
                   jax.ShapeDtypeStruct((NC, 1, H1P), jnp.float32)],
        compiler_params=cp_stats,
        cost_estimate=cost(2 * bp * in_dim * H1P,
                           xbytes + int(w1.size) * w1.dtype.itemsize + 2 * NC * H1P * 4),
    )(x, w1, b1)

    # Pass 2: recompute h1, apply BN1, layer 2 -> per-core partial BN2 statistics.
    s2p, q2p = pl.pallas_call(
        functools.partial(_stats2_kernel, batch=B, tile=tile,
                          tiles_per_core=tpc, mask_rows=mask_rows),
        grid=(NC, tpc),
        in_specs=[x_spec, w1_spec, v1_spec, s1_in, s1_in, v1_spec, v1_spec,
                  w2_spec, v2_spec],
        out_specs=[s2_out, s2_out],
        out_shape=[jax.ShapeDtypeStruct((NC, 1, H2P), jnp.float32),
                   jax.ShapeDtypeStruct((NC, 1, H2P), jnp.float32)],
        compiler_params=cp_stats,
        cost_estimate=cost(2 * bp * (in_dim * H1P + H1P * H2P),
                           xbytes + int(w1.size) * w1.dtype.itemsize
                           + int(w2.size) * w2.dtype.itemsize + 2 * NC * H2P * 4),
    )(x, w1, b1, s1p, q1p, g1, be1, w2, b2)

    # Pass 3: recompute everything, write lane-dense bf16 logits (sliced/cast below).
    x3 = pl.BlockSpec((tile, in_dim), lambda i: (i, 0))
    w1_3 = pl.BlockSpec((in_dim, H1P), lambda i: (0, 0))
    v1_3 = pl.BlockSpec((1, H1P), lambda i: (0, 0))
    s1_3 = pl.BlockSpec((NC, 1, H1P), lambda i: (0, 0, 0))
    w2_3 = pl.BlockSpec((H1P, H2P), lambda i: (0, 0))
    v2_3 = pl.BlockSpec((1, H2P), lambda i: (0, 0))
    s2_3 = pl.BlockSpec((NC, 1, H2P), lambda i: (0, 0, 0))
    w3_3 = pl.BlockSpec((H2P, OUTP), lambda i: (0, 0))
    v3_3 = pl.BlockSpec((1, OUTP), lambda i: (0, 0))
    o_3 = pl.BlockSpec((tile, OUTP), lambda i: (i, 0))

    out = pl.pallas_call(
        functools.partial(_out_kernel, batch=B),
        grid=(n_tiles,),
        in_specs=[x3, w1_3, v1_3, s1_3, s1_3, v1_3, v1_3,
                  w2_3, v2_3, s2_3, s2_3, v2_3, v2_3, w3_3, v3_3],
        out_specs=o_3,
        out_shape=jax.ShapeDtypeStruct((bp, OUTP), cdt),
        compiler_params=cp_out,
        cost_estimate=cost(2 * bp * (in_dim * H1P + H1P * H2P + H2P * OUTP),
                           xbytes + wbytes + bp * OUTP * 2),
    )(x, w1, b1, s1p, q1p, g1, be1, w2, b2, s2p, q2p, g2, be2, w3, b3)

    return out[:B, :output_dim].astype(jnp.float32)


def init_params(key, input_dim, hidden_dim, output_dim, *, compute_dtype=jnp.bfloat16):
    """Deterministic synthetic parameters matching the PyTorch module, zero-padded to
    128-lane widths at init time. Linear weights stored (in, out) so kernels do x @ W + b.
    Matmul operands use compute_dtype (bf16 halves HBM bytes, MXU-native); bias/BN stay f32.
    NOTE: padded gamma/beta/bias columns MUST stay exactly zero for correctness."""
    hid2 = 64
    h1p = _round_up(hidden_dim, LANES)
    h2p = _round_up(hid2, LANES)
    outp = _round_up(output_dim, LANES)
    ks = jax.random.split(key, 3)

    def lin(k, fan_in, fan_out, rows_p, cols_p):
        bound = 1.0 / math.sqrt(fan_in)
        kw, kb = jax.random.split(k)
        w = jax.random.uniform(kw, (fan_in, fan_out), jnp.float32, -bound, bound)
        b = jax.random.uniform(kb, (1, fan_out), jnp.float32, -bound, bound)
        w = jnp.pad(w, ((0, rows_p - fan_in), (0, cols_p - fan_out))).astype(compute_dtype)
        b = jnp.pad(b, ((0, 0), (0, cols_p - fan_out)))
        return w, b

    w1, b1 = lin(ks[0], input_dim, hidden_dim, input_dim, h1p)
    w2, b2 = lin(ks[1], hidden_dim, hid2, h1p, h2p)
    w3, b3 = lin(ks[2], hid2, output_dim, h2p, outp)
    return {
        "w1": w1, "b1": b1,
        "g1": jnp.pad(jnp.ones((1, hidden_dim), jnp.float32),
                      ((0, 0), (0, h1p - hidden_dim))),
        "be1": jnp.zeros((1, h1p), jnp.float32),
        "w2": w2, "b2": b2,
        "g2": jnp.pad(jnp.ones((1, hid2), jnp.float32), ((0, 0), (0, h2p - hid2))),
        "be2": jnp.zeros((1, h2p), jnp.float32),
        "w3": w3, "b3": b3,
    }


def _reference_forward(x, params, output_dim):
    """Pure-JAX reference mirroring the kernel math (same padded/bf16 params)."""
    cdt = params["w1"].dtype
    x = x.astype(cdt)

    def bn(h, gamma, beta):
        mean = jnp.mean(h, axis=0, keepdims=True)
        var = jnp.maximum(jnp.mean(h * h, axis=0, keepdims=True) - mean * mean, 0.0)
        return (h - mean) * jax.lax.rsqrt(var + BN_EPS) * gamma + beta

    h1 = jnp.maximum(jnp.dot(x, params["w1"], preferred_element_type=jnp.float32)
                     + params["b1"], 0.0)
    h1 = bn(h1, params["g1"], params["be1"])
    h2 = jnp.maximum(jnp.dot(h1.astype(cdt), params["w2"],
                             preferred_element_type=jnp.float32) + params["b2"], 0.0)
    h2 = bn(h2, params["g2"], params["be2"])
    out = jnp.dot(h2.astype(cdt), params["w3"],
                  preferred_element_type=jnp.float32) + params["b3"]
    return out[:, :output_dim]


if __name__ == "__main__":
    key = jax.random.PRNGKey(0)
    k_p, k_x, k_xb = jax.random.split(key, 3)

    batch, input_dim, hidden_dim, output_dim = 8, 32, 32, 1
    params = init_params(k_p, input_dim, hidden_dim, output_dim)

    # Small batch -> fused single-block kernel (exact full-batch BN stats in one kernel).
    x = jax.random.normal(k_x, (batch, input_dim), jnp.float32)
    out = jax.block_until_ready(binary_classification_forward(x, params, output_dim))
    assert out.shape == (batch, output_dim), out.shape
    ref = jax.block_until_ready(_reference_forward(x, params, output_dim))
    np.testing.assert_allclose(np.asarray(out), np.asarray(ref), rtol=5e-2, atol=5e-2)

    # Non-tile-multiple batch, fused path disabled -> 3-pass recompute pipeline
    # (exercises padded-row masking, per-core partial BN stats, cross-tile accumulation).
    big_batch = 300
    xb = jax.random.normal(k_xb, (big_batch, input_dim), jnp.float32)
    out_b = jax.block_until_ready(
        binary_classification_forward(xb, params, output_dim, tile=128, fused_row_limit=0))
    assert out_b.shape == (big_batch, output_dim), out_b.shape
    ref_b = jax.block_until_ready(_reference_forward(xb, params, output_dim))
    np.testing.assert_allclose(np.asarray(out_b), np.asarray(ref_b), rtol=5e-2, atol=5e-2)

    print("KERNEL_OK")
</pallas_src>

<mosaic_0001>
module attributes {stable_mosaic.version = 11 : i64} {
  func.func @_fused_kernel(%arg0: memref<8x32xbf16, #tpu.memory_space<vmem>>, %arg1: memref<32x128xbf16, #tpu.memory_space<vmem>>, %arg2: memref<1x128xf32, #tpu.memory_space<vmem>>, %arg3: memref<1x128xf32, #tpu.memory_space<vmem>>, %arg4: memref<1x128xf32, #tpu.memory_space<vmem>>, %arg5: memref<128x128xbf16, #tpu.memory_space<vmem>>, %arg6: memref<1x128xf32, #tpu.memory_space<vmem>>, %arg7: memref<1x128xf32, #tpu.memory_space<vmem>>, %arg8: memref<1x128xf32, #tpu.memory_space<vmem>>, %arg9: memref<128x128xbf16, #tpu.memory_space<vmem>>, %arg10: memref<1x128xf32, #tpu.memory_space<vmem>>, %arg11: memref<8x128xbf16, #tpu.memory_space<vmem>>) attributes {dimension_semantics = [], scalar_prefetch = 0 : i64, scratch_operands = 0 : i64, tpu.core_type = #tpu.core_type<tc>} {
    %c0 = arith.constant 0 : index
    %c0_0 = arith.constant 0 : index
    %0 = vector.load %arg0[%c0, %c0_0] : memref<8x32xbf16, #tpu.memory_space<vmem>>, vector<8x32xbf16>
    %c0_1 = arith.constant 0 : index
    %c0_2 = arith.constant 0 : index
    %1 = vector.load %arg1[%c0_1, %c0_2] : memref<32x128xbf16, #tpu.memory_space<vmem>>, vector<32x128xbf16>
    %cst = arith.constant dense<0.000000e+00> : vector<8x128xf32>
    %2 = tpu.matmul %0, %1, %cst {dimension_numbers = #tpu.dot_dimension_numbers<[1], [0], [0], [1], [0, 0, 1, 1], [], []>} : vector<8x32xbf16>, vector<32x128xbf16>, vector<8x128xf32> -> vector<8x128xf32>
    %c0_3 = arith.constant 0 : index
    %c0_4 = arith.constant 0 : index
    %3 = vector.load %arg2[%c0_3, %c0_4] : memref<1x128xf32, #tpu.memory_space<vmem>>, vector<1x128xf32>
    %4 = vector.broadcast %3 : vector<1x128xf32> to vector<8x128xf32>
    %5 = arith.addf %2, %4 : vector<8x128xf32>
    %cst_5 = arith.constant 0.000000e+00 : f32
    %6 = vector.broadcast %cst_5 : f32 to vector<8x128xf32>
    %7 = arith.maximumf %5, %6 : vector<8x128xf32>
    %cst_6 = arith.constant dense<0.000000e+00> : vector<128xf32>
    %8 = vector.multi_reduction <add>, %7, %cst_6 [0] : vector<8x128xf32> to vector<128xf32>
    %9 = vector.shape_cast %8 : vector<128xf32> to vector<1x128xf32>
    %10 = arith.mulf %7, %7 : vector<8x128xf32>
    %cst_7 = arith.constant dense<0.000000e+00> : vector<128xf32>
    %11 = vector.multi_reduction <add>, %10, %cst_7 [0] : vector<8x128xf32> to vector<128xf32>
    %12 = vector.shape_cast %11 : vector<128xf32> to vector<1x128xf32>
    %c0_8 = arith.constant 0 : index
    %c0_9 = arith.constant 0 : index
    %13 = vector.load %arg3[%c0_8, %c0_9] : memref<1x128xf32, #tpu.memory_space<vmem>>, vector<1x128xf32>
    %c0_10 = arith.constant 0 : index
    %c0_11 = arith.constant 0 : index
    %14 = vector.load %arg4[%c0_10, %c0_11] : memref<1x128xf32, #tpu.memory_space<vmem>>, vector<1x128xf32>
    %cst_12 = arith.constant 1.250000e-01 : f32
    %15 = vector.broadcast %cst_12 : f32 to vector<1x128xf32>
    %16 = arith.mulf %9, %15 : vector<1x128xf32>
    %cst_13 = arith.constant 1.250000e-01 : f32
    %17 = vector.broadcast %cst_13 : f32 to vector<1x128xf32>
    %18 = arith.mulf %12, %17 : vector<1x128xf32>
    %19 = arith.mulf %16, %16 : vector<1x128xf32>
    %20 = arith.subf %18, %19 : vector<1x128xf32>
    %cst_14 = arith.constant 0.000000e+00 : f32
    %21 = vector.broadcast %cst_14 : f32 to vector<1x128xf32>
    %22 = arith.maximumf %20, %21 : vector<1x128xf32>
    %23 = vector.broadcast %16 : vector<1x128xf32> to vector<8x128xf32>
    %24 = arith.subf %7, %23 : vector<8x128xf32>
    %cst_15 = arith.constant 9.99999974E-6 : f32
    %25 = vector.broadcast %cst_15 : f32 to vector<1x128xf32>
    %26 = arith.addf %22, %25 : vector<1x128xf32>
    %27 = math.rsqrt %26 : vector<1x128xf32>
    %28 = vector.broadcast %27 : vector<1x128xf32> to vector<8x128xf32>
    %29 = arith.mulf %24, %28 : vector<8x128xf32>
    %30 = vector.broadcast %13 : vector<1x128xf32> to vector<8x128xf32>
    %31 = arith.mulf %29, %30 : vector<8x128xf32>
    %32 = vector.broadcast %14 : vector<1x128xf32> to vector<8x128xf32>
    %33 = arith.addf %31, %32 : vector<8x128xf32>
    %34 = arith.truncf %33 : vector<8x128xf32> to vector<8x128xbf16>
    %c0_16 = arith.constant 0 : index
    %c0_17 = arith.constant 0 : index
    %35 = vector.load %arg5[%c0_16, %c0_17] : memref<128x128xbf16, #tpu.memory_space<vmem>>, vector<128x128xbf16>
    %cst_18 = arith.constant dense<0.000000e+00> : vector<8x128xf32>
    %36 = tpu.matmul %34, %35, %cst_18 {dimension_numbers = #tpu.dot_dimension_numbers<[1], [0], [0], [1], [0, 0, 1, 1], [], []>} : vector<8x128xbf16>, vector<128x128xbf16>, vector<8x128xf32> -> vector<8x128xf32>
    %c0_19 = arith.constant 0 : index
    %c0_20 = arith.constant 0 : index
    %37 = vector.load %arg6[%c0_19, %c0_20] : memref<1x128xf32, #tpu.memory_space<vmem>>, vector<1x128xf32>
    %38 = vector.broadcast %37 : vector<1x128xf32> to vector<8x128xf32>
    %39 = arith.addf %36, %38 : vector<8x128xf32>
    %cst_21 = arith.constant 0.000000e+00 : f32
    %40 = vector.broadcast %cst_21 : f32 to vector<8x128xf32>
    %41 = arith.maximumf %39, %40 : vector<8x128xf32>
    %cst_22 = arith.constant dense<0.000000e+00> : vector<128xf32>
    %42 = vector.multi_reduction <add>, %41, %cst_22 [0] : vector<8x128xf32> to vector<128xf32>
    %43 = vector.shape_cast %42 : vector<128xf32> to vector<1x128xf32>
    %44 = arith.mulf %41, %41 : vector<8x128xf32>
    %cst_23 = arith.constant dense<0.000000e+00> : vector<128xf32>
    %45 = vector.multi_reduction <add>, %44, %cst_23 [0] : vector<8x128xf32> to vector<128xf32>
    %46 = vector.shape_cast %45 : vector<128xf32> to vector<1x128xf32>
    %c0_24 = arith.constant 0 : index
    %c0_25 = arith.constant 0 : index
    %47 = vector.load %arg7[%c0_24, %c0_25] : memref<1x128xf32, #tpu.memory_space<vmem>>, vector<1x128xf32>
    %c0_26 = arith.constant 0 : index
    %c0_27 = arith.constant 0 : index
    %48 = vector.load %arg8[%c0_26, %c0_27] : memref<1x128xf32, #tpu.memory_space<vmem>>, vector<1x128xf32>
    %cst_28 = arith.constant 1.250000e-01 : f32
    %49 = vector.broadcast %cst_28 : f32 to vector<1x128xf32>
    %50 = arith.mulf %43, %49 : vector<1x128xf32>
    %cst_29 = arith.constant 1.250000e-01 : f32
    %51 = vector.broadcast %cst_29 : f32 to vector<1x128xf32>
    %52 = arith.mulf %46, %51 : vector<1x128xf32>
    %53 = arith.mulf %50, %50 : vector<1x128xf32>
    %54 = arith.subf %52, %53 : vector<1x128xf32>
    %cst_30 = arith.constant 0.000000e+00 : f32
    %55 = vector.broadcast %cst_30 : f32 to vector<1x128xf32>
    %56 = arith.maximumf %54, %55 : vector<1x128xf32>
    %57 = vector.broadcast %50 : vector<1x128xf32> to vector<8x128xf32>
    %58 = arith.subf %41, %57 : vector<8x128xf32>
    %cst_31 = arith.constant 9.99999974E-6 : f32
    %59 = vector.broadcast %cst_31 : f32 to vector<1x128xf32>
    %60 = arith.addf %56, %59 : vector<1x128xf32>
    %61 = math.rsqrt %60 : vector<1x128xf32>
    %62 = vector.broadcast %61 : vector<1x128xf32> to vector<8x128xf32>
    %63 = arith.mulf %58, %62 : vector<8x128xf32>
    %64 = vector.broadcast %47 : vector<1x128xf32> to vector<8x128xf32>
    %65 = arith.mulf %63, %64 : vector<8x128xf32>
    %66 = vector.broadcast %48 : vector<1x128xf32> to vector<8x128xf32>
    %67 = arith.addf %65, %66 : vector<8x128xf32>
    %68 = arith.truncf %67 : vector<8x128xf32> to vector<8x128xbf16>
    %c0_32 = arith.constant 0 : index
    %c0_33 = arith.constant 0 : index
    %69 = vector.load %arg9[%c0_32, %c0_33] : memref<128x128xbf16, #tpu.memory_space<vmem>>, vector<128x128xbf16>
    %cst_34 = arith.constant dense<0.000000e+00> : vector<8x128xf32>
    %70 = tpu.matmul %68, %69, %cst_34 {dimension_numbers = #tpu.dot_dimension_numbers<[1], [0], [0], [1], [0, 0, 1, 1], [], []>} : vector<8x128xbf16>, vector<128x128xbf16>, vector<8x128xf32> -> vector<8x128xf32>
    %c0_35 = arith.constant 0 : index
    %c0_36 = arith.constant 0 : index
    %71 = vector.load %arg10[%c0_35, %c0_36] : memref<1x128xf32, #tpu.memory_space<vmem>>, vector<1x128xf32>
    %72 = vector.broadcast %71 : vector<1x128xf32> to vector<8x128xf32>
    %73 = arith.addf %70, %72 : vector<8x128xf32>
    %74 = arith.truncf %73 : vector<8x128xf32> to vector<8x128xbf16>
    %c0_37 = arith.constant 0 : index
    %c0_38 = arith.constant 0 : index
    %75 = vector.load %arg11[%c0_37, %c0_38] : memref<8x128xbf16, #tpu.memory_space<vmem>>, vector<8x128xbf16>
    tpu.vector_store %arg11[%c0_37, %c0_38], %74 {strides = array<i32>} : memref<8x128xbf16, #tpu.memory_space<vmem>>, vector<8x128xbf16>,
    return
  }
}

</mosaic_0001>

<llo_original>
// kernel: tpu_custom_call.1
$region0: #{tpu_custom_call.1}
  #allocation0 [shape = 'u32[]', space=smem, size = 0x4, offset = 0x4, fixed_abs, tag = 'smem constant byte address 0x4 - core index']
  #allocation1 [shape = 'u32[72,128]{1,0:T(1,128)}', space=vmem, size = 0x9000, scoped, tag = 'internal scratch']
  %s0 = inlined_call_operand.hbm [shape: bf16[8,32], index: 0, kind: input, shape index: {}]
  %s1 = inlined_call_operand.hbm [shape: bf16[32,128], index: 1, kind: input, shape index: {}]
  %s2 = inlined_call_operand.vmem [shape: f32[1,128], index: 2, kind: input, shape index: {}]
  %s3 = inlined_call_operand.vmem [shape: f32[1,128], index: 3, kind: input, shape index: {}]
  %s4 = inlined_call_operand.vmem [shape: f32[1,128], index: 4, kind: input, shape index: {}]
  %s5 = inlined_call_operand.hbm [shape: bf16[128,128], index: 5, kind: input, shape index: {}]
  %s6 = inlined_call_operand.vmem [shape: f32[1,128], index: 6, kind: input, shape index: {}]
  %s7 = inlined_call_operand.vmem [shape: f32[1,128], index: 7, kind: input, shape index: {}]
  %s8 = inlined_call_operand.vmem [shape: f32[1,128], index: 8, kind: input, shape index: {}]
  %s9 = inlined_call_operand.hbm [shape: bf16[128,128], index: 9, kind: input, shape index: {}]
  %s10 = inlined_call_operand.vmem [shape: f32[1,128], index: 10, kind: input, shape index: {}]
  %s11 = inlined_call_operand.hbm [shape: bf16[8,128], index: 11, kind: output, shape index: {}]
  %s12 = sld [smem:[#allocation0]]
  $region70: #{tpu_custom_call.1} parent=0
    _
  %s14 = ssub.s32 1, %s12
  %s15 = scalar_select 0, %s14, %s12
  $region1: #{tpu_custom_call.1} parent=0
    #allocation2 [shape = 'u8[2048]{0}', space=vmem, size = 0x800, scoped, tag = 'input window, operand 0, single buffered']
    #allocation3 [shape = 's32[1]{0}', space=sflag, size = 0x4, scoped, tag = 'scoped memory for tpu_custom_call.1']
    #allocation4 [shape = 's32[1]{0}', space=sflag, size = 0x4, scoped, tag = 'scoped memory for tpu_custom_call.1']
    #allocation5 [shape = 'u8[8192]{0}', space=vmem, size = 0x2000, scoped, tag = 'input window, operand 1, single buffered']
    #allocation6 [shape = 's32[1]{0}', space=sflag, size = 0x4, scoped, tag = 'scoped memory for tpu_custom_call.1']
    #allocation7 [shape = 'u8[32768]{0}', space=vmem, size = 0x8000, scoped, tag = 'input window, operand 5, single buffered']
    #allocation8 [shape = 'u8[32768]{0}', space=vmem, size = 0x8000, scoped, tag = 'input window, operand 9, single buffered']
    #allocation9 [shape = 's32[1]{0}', space=sflag, size = 0x4, scoped, tag = 'scoped memory for tpu_custom_call.1']
    #allocation10 [shape = 'u8[2048]{0}', space=vmem, size = 0x800, scoped, tag = 'output window, operand 0, single buffered']
    %16 = vsyncpa [#allocation3], 0
    %17 = vsyncpa [#allocation6], 0
    %18 = vsyncpa [#allocation9], 0
    %19 = vsyncpa [#allocation4], 0
    // Predicated region
    $region2: #{tpu_custom_call.1} parent=1 // pred_check
      _
    $region3: #{tpu_custom_call.1} parent=1 // pred_check_branch
      %21 = sbr.rel (0) target = $region5
    $region4: #{tpu_custom_call.1} parent=1 // pred_region
      %23 = vsyncadd [#allocation3], 0
      %s25 = sshll.u32 %s0, 4
      %s26 = int_to_ptr.hbm [resolvable:$true] %s25
      %s27 = sshll.u32 [#allocation2], 4
      %s28 = int_to_ptr.vmem [resolvable:$true] %s27
      %30 = dma.hbm_to_vmem [thread:$0]  %s26, 64, %s28, [#allocation3]
    $region5: #{tpu_custom_call.1} parent=1 // pred_fallthru
      _
    // Predicated region
    $region6: #{tpu_custom_call.1} parent=1 // pred_check
      _
    $region7: #{tpu_custom_call.1} parent=1 // pred_check_branch
      %32 = sbr.rel (0) target = $region9
    $region8: #{tpu_custom_call.1} parent=1 // pred_region
      %34 = vsyncadd [#allocation6], 0
      %s35 = sshll.u32 %s1, 4
      %s36 = int_to_ptr.hbm [resolvable:$true] %s35
      %s37 = sshll.u32 [#allocation5], 4
      %s38 = int_to_ptr.vmem [resolvable:$true] %s37
      %43 = dma.hbm_to_vmem [thread:$0]  %s36, 256, %s38, [#allocation6], 64, 64, 4
    $region9: #{tpu_custom_call.1} parent=1 // pred_fallthru
      _
    // Predicated region
    $region10: #{tpu_custom_call.1} parent=1 // pred_check
      _
    $region11: #{tpu_custom_call.1} parent=1 // pred_check_branch
      %45 = sbr.rel (0) target = $region13
    $region12: #{tpu_custom_call.1} parent=1 // pred_region
      _
    $region13: #{tpu_custom_call.1} parent=1 // pred_fallthru
      _
    // Predicated region
    $region14: #{tpu_custom_call.1} parent=1 // pred_check
      _
    $region15: #{tpu_custom_call.1} parent=1 // pred_check_branch
      %47 = sbr.rel (0) target = $region17
    $region16: #{tpu_custom_call.1} parent=1 // pred_region
      _
    $region17: #{tpu_custom_call.1} parent=1 // pred_fallthru
      _
    // Predicated region
    $region18: #{tpu_custom_call.1} parent=1 // pred_check
      _
    $region19: #{tpu_custom_call.1} parent=1 // pred_check_branch
      %49 = sbr.rel (0) target = $region21
    $region20: #{tpu_custom_call.1} parent=1 // pred_region
      _
    $region21: #{tpu_custom_call.1} parent=1 // pred_fallthru
      _
    // Predicated region
    $region22: #{tpu_custom_call.1} parent=1 // pred_check
      _
    $region23: #{tpu_custom_call.1} parent=1 // pred_check_branch
      %51 = sbr.rel (0) target = $region25
    $region24: #{tpu_custom_call.1} parent=1 // pred_region
      %53 = vsyncadd [#allocation6], 0
      %s54 = sshll.u32 %s5, 4
      %s55 = int_to_ptr.hbm [resolvable:$true] %s54
      %s56 = sshll.u32 [#allocation7], 4
      %s57 = int_to_ptr.vmem [resolvable:$true] %s56
      %62 = dma.hbm_to_vmem [thread:$0]  %s55, 1024, %s57, [#allocation6], 64, 64, 4
    $region25: #{tpu_custom_call.1} parent=1 // pred_fallthru
      _
    // Predicated region
    $region26: #{tpu_custom_call.1} parent=1 // pred_check
      _
    $region27: #{tpu_custom_call.1} parent=1 // pred_check_branch
      %64 = sbr.rel (0) target = $region29
    $region28: #{tpu_custom_call.1} parent=1 // pred_region
      _
    $region29: #{tpu_custom_call.1} parent=1 // pred_fallthru
      _
    // Predicated region
    $region30: #{tpu_custom_call.1} parent=1 // pred_check
      _
    $region31: #{tpu_custom_call.1} parent=1 // pred_check_branch
      %66 = sbr.rel (0) target = $region33
    $region32: #{tpu_custom_call.1} parent=1 // pred_region
      _
    $region33: #{tpu_custom_call.1} parent=1 // pred_fallthru
      _
    // Predicated region
    $region34: #{tpu_custom_call.1} parent=1 // pred_check
      _
    $region35: #{tpu_custom_call.1} parent=1 // pred_check_branch
      %68 = sbr.rel (0) target = $region37
    $region36: #{tpu_custom_call.1} parent=1 // pred_region
      _
    $region37: #{tpu_custom_call.1} parent=1 // pred_fallthru
      _
    // Predicated region
    $region38: #{tpu_custom_call.1} parent=1 // pred_check
      _
    $region39: #{tpu_custom_call.1} parent=1 // pred_check_branch
      %70 = sbr.rel (0) target = $region41
    $region40: #{tpu_custom_call.1} parent=1 // pred_region
      %72 = vsyncadd [#allocation9], 0
      %s73 = sshll.u32 %s9, 4
      %s74 = int_to_ptr.hbm [resolvable:$true] %s73
      %s75 = sshll.u32 [#allocation8], 4
      %s76 = int_to_ptr.vmem [resolvable:$true] %s75
      %81 = dma.hbm_to_vmem [thread:$0]  %s74, 1024, %s76, [#allocation9], 64, 64, 4
    $region41: #{tpu_custom_call.1} parent=1 // pred_fallthru
      _
    // Predicated region
    $region42: #{tpu_custom_call.1} parent=1 // pred_check
      _
    $region43: #{tpu_custom_call.1} parent=1 // pred_check_branch
      %83 = sbr.rel (0) target = $region45
    $region44: #{tpu_custom_call.1} parent=1 // pred_region
      _
    $region45: #{tpu_custom_call.1} parent=1 // pred_fallthru
      _
    // Predicated region
    $region46: #{tpu_custom_call.1} parent=1 // pred_check
      _
    $region47: #{tpu_custom_call.1} parent=1 // pred_check_branch
      %85 = sbr.rel (0) target = $region49
    $region48: #{tpu_custom_call.1} parent=1 // pred_region
      %87 = dma.done [#allocation3], 64
    $region49: #{tpu_custom_call.1} parent=1 // pred_fallthru
      _
    // Predicated region
    $region50: #{tpu_custom_call.1} parent=1 // pred_check
      _
    $region51: #{tpu_custom_call.1} parent=1 // pred_check_branch
      %89 = sbr.rel (0) target = $region53
    $region52: #{tpu_custom_call.1} parent=1 // pred_region
      %91 = dma.done [#allocation6], 256
    $region53: #{tpu_custom_call.1} parent=1 // pred_fallthru
      _
    // Predicated region
    $region54: #{tpu_custom_call.1} parent=1 // pred_check
      _
    $region55: #{tpu_custom_call.1} parent=1 // pred_check_branch
      %93 = sbr.rel (0) target = $region57
    $region56: #{tpu_custom_call.1} parent=1 // pred_region
      %95 = dma.done [#allocation6], 1024
    $region57: #{tpu_custom_call.1} parent=1 // pred_fallthru
      _
    // Predicated region
    $region58: #{tpu_custom_call.1} parent=1 // pred_check
      _
    $region59: #{tpu_custom_call.1} parent=1 // pred_check_branch
      %97 = sbr.rel (0) target = $region61
    $region60: #{tpu_custom_call.1} parent=1 // pred_region
      %99 = dma.done [#allocation9], 1024
    $region61: #{tpu_custom_call.1} parent=1 // pred_fallthru
      _
    %v101 = vld [vmem:[#allocation2] sm:$0xf]
    %v102 = vld [vmem:[#allocation5] sm:$0xf]
    %v103 = vld [vmem:[#allocation5 + $0x4] sm:$0xf]
    %v104 = vld [vmem:[#allocation5 + $0x8] sm:$0xf]
    %v105 = vld [vmem:[#allocation5 + $0xc] sm:$0xf]
    %v106 = vld [vmem:[%s2] sm:$0x1]
    %v108 = vperm.slane %v106, 0
    %v114 = vunpack.c.l.b16 %v102
    %v115 = vunpack.c.l.b16 %v103
    %v116 = vunpack.c.l.b16 %v104
    %v117 = vunpack.c.l.b16 %v105
    %v118 = vpack.c.b16 %v115, %v114
    %v119 = vpack.c.b16 %v117, %v116
    %vm122 = vcmask 261120
    %v124 = vsel %vm122, %v101, 0
    %126 = vmatpush.bf16.msra.mxu0 0
    %127 = vmatpush.bf16.msra.mxu0 0
    %128 = vmatpush.bf16.msra.mxu0 0
    %129 = vmatpush.bf16.msra.mxu0 0
    %130 = vmatpush.bf16.msra.mxu0 0
    %131 = vmatpush.bf16.msra.mxu0 0
    %132 = vmatpush.bf16.msra.mxu0 %v119
    %133 = vmatpush.bf16.msra.mxu0 %v118
    %134 = vmatmul.bf16.gmra.mxu0 %v124
    %v135 = vpop.f32.mrf.mxu0
    %v136 = vadd.f32 %v108, %v135
    %v137 = vpop.f32.mrf.mxu0
    %138 = vdwg.mxu0
    %v139 = vmax.f32 %v136, 0.0
    %v140 = vrot.slane %v139, 4
    %v141 = vadd.f32 %v139, %v140
    %v142 = vrot.slane %v141, 2
    %v143 = vadd.f32 %v141, %v142
    %v144 = vrot.slane %v143, 1
    %v145 = vadd.f32 %v143, %v144
    %v146 = vmul.f32 %v139, %v139
    %v147 = vrot.slane %v146, 4
    %v148 = vadd.f32 %v146, %v147
    %v149 = vrot.slane %v148, 2
    %v150 = vadd.f32 %v148, %v149
    %v151 = vrot.slane %v150, 1
    %v152 = vadd.f32 %v150, %v151
    %v153 = vld [vmem:[%s3] sm:$0x1]
    %v154 = vld [vmem:[%s4] sm:$0x1]
    %v155 = vmul.f32 %v145, 0.125
    %v156 = vmul.f32 %v152, 0.125
    %v157 = vmul.f32 %v155, %v155
    %v158 = vsub.f32 %v156, %v157
    %v159 = vmax.f32 %v158, 0.0
    %v160 = vsub.f32 %v139, %v155
    %v161 = vadd.f32 %v159, 1e-05
    %v162 = vrsqrt.pop %v161
    %v163 = vmul.f32 %v162, %v161
    %v164 = vmul.f32 %v163, %v162
    %v165 = vmul.f32 0.5, %v164
    %v166 = vsub.f32 1.5, %v165
    %v167 = vmul.f32 %v162, %v166
    %vm168 = vweird.f32 %v161
    %vm169 = vweird.f32 %v162
    %vm170 = vmor %vm168, %vm169
    %v171 = vsel %vm170, %v162, %v167
    %v172 = vmul.f32 %v160, %v171
    %v174 = vperm.slane %v153, 0
    %v176 = vmul.f32 %v172, %v174
    %v178 = vperm.slane %v154, 0
    %v180 = vadd.f32 %v176, %v178
    %v181 = vpack.c.bf16 %v180, %v180
    %v182 = vld [vmem:[#allocation7] sm:$0xf]
    %v183 = vld [vmem:[#allocation7 + $0x4] sm:$0xf]
    %v184 = vld [vmem:[#allocation7 + $0x8] sm:$0xf]
    %v185 = vld [vmem:[#allocation7 + $0xc] sm:$0xf]
    %v186 = vld [vmem:[#allocation7 + $0x10] sm:$0xf]
    %v187 = vld [vmem:[#allocation7 + $0x14] sm:$0xf]
    %v188 = vld [vmem:[#allocation7 + $0x18] sm:$0xf]
    %v189 = vld [vmem:[#allocation7 + $0x1c] sm:$0xf]
    %v190 = vld [vmem:[#allocation7 + $0x20] sm:$0xf]
    %v191 = vld [vmem:[#allocation7 + $0x24] sm:$0xf]
    %v192 = vld [vmem:[#allocation7 + $0x28] sm:$0xf]
    %v193 = vld [vmem:[#allocation7 + $0x2c] sm:$0xf]
    %v194 = vld [vmem:[#allocation7 + $0x30] sm:$0xf]
    %v195 = vld [vmem:[#allocation7 + $0x34] sm:$0xf]
    %v196 = vld [vmem:[#allocation7 + $0x38] sm:$0xf]
    %v197 = vld [vmem:[#allocation7 + $0x3c] sm:$0xf]
    %v198 = vld [vmem:[%s6] sm:$0x1]
    %v200 = vperm.slane %v198, 0
    %v218 = vunpack.c.l.b16 %v182
    %v219 = vunpack.c.l.b16 %v183
    %v220 = vunpack.c.l.b16 %v184
    %v221 = vunpack.c.l.b16 %v185
    %v222 = vunpack.c.l.b16 %v186
    %v223 = vunpack.c.l.b16 %v187
    %v224 = vunpack.c.l.b16 %v188
    %v225 = vunpack.c.l.b16 %v189
    %v226 = vunpack.c.l.b16 %v190
    %v227 = vunpack.c.l.b16 %v191
    %v228 = vunpack.c.l.b16 %v192
    %v229 = vunpack.c.l.b16 %v193
    %v230 = vunpack.c.l.b16 %v194
    %v231 = vunpack.c.l.b16 %v195
    %v232 = vunpack.c.l.b16 %v196
    %v233 = vunpack.c.l.b16 %v197
    %v234 = vpack.c.b16 %v219, %v218
    %v235 = vpack.c.b16 %v221, %v220
    %v236 = vpack.c.b16 %v223, %v222
    %v237 = vpack.c.b16 %v225, %v224
    %v238 = vpack.c.b16 %v227, %v226
    %v239 = vpack.c.b16 %v229, %v228
    %v240 = vpack.c.b16 %v231, %v230
    %v241 = vpack.c.b16 %v233, %v232
    %250 = vmatpush.bf16.msra.mxu0 %v241
    %251 = vmatpush.bf16.msra.mxu0 %v240
    %252 = vmatpush.bf16.msra.mxu0 %v239
    %253 = vmatpush.bf16.msra.mxu0 %v238
    %254 = vmatpush.bf16.msra.mxu0 %v237
    %255 = vmatpush.bf16.msra.mxu0 %v236
    %256 = vmatpush.bf16.msra.mxu0 %v235
    %257 = vmatpush.bf16.msra.mxu0 %v234
    %258 = vmatmul.bf16.gmra.mxu0 %v181
    %v259 = vpop.f32.mrf.mxu0
    %v260 = vadd.f32 %v200, %v259
    %v261 = vpop.f32.mrf.mxu0
    %262 = vdwg.mxu0
    %v263 = vmax.f32 %v260, 0.0
    %v264 = vrot.slane %v263, 4
    %v265 = vadd.f32 %v263, %v264
    %v266 = vrot.slane %v265, 2
    %v267 = vadd.f32 %v265, %v266
    %v268 = vrot.slane %v267, 1
    %v269 = vadd.f32 %v267, %v268
    %v270 = vmul.f32 %v263, %v263
    %v271 = vrot.slane %v270, 4
    %v272 = vadd.f32 %v270, %v271
    %v273 = vrot.slane %v272, 2
    %v274 = vadd.f32 %v272, %v273
    %v275 = vrot.slane %v274, 1
    %v276 = vadd.f32 %v274, %v275
    %v277 = vld [vmem:[%s7] sm:$0x1]
    %v278 = vld [vmem:[%s8] sm:$0x1]
    %v279 = vmul.f32 %v269, 0.125
    %v280 = vmul.f32 %v276, 0.125
    %v281 = vmul.f32 %v279, %v279
    %v282 = vsub.f32 %v280, %v281
    %v283 = vmax.f32 %v282, 0.0
    %v284 = vsub.f32 %v263, %v279
    %v285 = vadd.f32 %v283, 1e-05
    %v286 = vrsqrt.pop %v285
    %v287 = vmul.f32 %v286, %v285
    %v288 = vmul.f32 %v287, %v286
    %v289 = vmul.f32 0.5, %v288
    %v290 = vsub.f32 1.5, %v289
    %v291 = vmul.f32 %v286, %v290
    %vm292 = vweird.f32 %v285
    %vm293 = vweird.f32 %v286
    %vm294 = vmor %vm292, %vm293
    %v295 = vsel %vm294, %v286, %v291
    %v296 = vmul.f32 %v284, %v295
    %v298 = vperm.slane %v277, 0
    %v300 = vmul.f32 %v296, %v298
    %v302 = vperm.slane %v278, 0
    %v304 = vadd.f32 %v300, %v302
    %v305 = vpack.c.bf16 %v304, %v304
    %v306 = vld [vmem:[#allocation8] sm:$0xf]
    %v307 = vld [vmem:[#allocation8 + $0x4] sm:$0xf]
    %v308 = vld [vmem:[#allocation8 + $0x8] sm:$0xf]
    %v309 = vld [vmem:[#allocation8 + $0xc] sm:$0xf]
    %v310 = vld [vmem:[#allocation8 + $0x10] sm:$0xf]
    %v311 = vld [vmem:[#allocation8 + $0x14] sm:$0xf]
    %v312 = vld [vmem:[#allocation8 + $0x18] sm:$0xf]
    %v313 = vld [vmem:[#allocation8 + $0x1c] sm:$0xf]
    %v314 = vld [vmem:[#allocation8 + $0x20] sm:$0xf]
    %v315 = vld [vmem:[#allocation8 + $0x24] sm:$0xf]
    %v316 = vld [vmem:[#allocation8 + $0x28] sm:$0xf]
    %v317 = vld [vmem:[#allocation8 + $0x2c] sm:$0xf]
    %v318 = vld [vmem:[#allocation8 + $0x30] sm:$0xf]
    %v319 = vld [vmem:[#allocation8 + $0x34] sm:$0xf]
    %v320 = vld [vmem:[#allocation8 + $0x38] sm:$0xf]
    %v321 = vld [vmem:[#allocation8 + $0x3c] sm:$0xf]
    %v322 = vld [vmem:[%s10] sm:$0x1]
    %v324 = vperm.slane %v322, 0
    %v342 = vunpack.c.l.b16 %v306
    %v343 = vunpack.c.l.b16 %v307
    %v344 = vunpack.c.l.b16 %v308
    %v345 = vunpack.c.l.b16 %v309
    %v346 = vunpack.c.l.b16 %v310
    %v347 = vunpack.c.l.b16 %v311
    %v348 = vunpack.c.l.b16 %v312
    %v349 = vunpack.c.l.b16 %v313
    %v350 = vunpack.c.l.b16 %v314
    %v351 = vunpack.c.l.b16 %v315
    %v352 = vunpack.c.l.b16 %v316
    %v353 = vunpack.c.l.b16 %v317
    %v354 = vunpack.c.l.b16 %v318
    %v355 = vunpack.c.l.b16 %v319
    %v356 = vunpack.c.l.b16 %v320
    %v357 = vunpack.c.l.b16 %v321
    %v358 = vpack.c.b16 %v343, %v342
    %v359 = vpack.c.b16 %v345, %v344
    %v360 = vpack.c.b16 %v347, %v346
    %v361 = vpack.c.b16 %v349, %v348
    %v362 = vpack.c.b16 %v351, %v350
    %v363 = vpack.c.b16 %v353, %v352
    %v364 = vpack.c.b16 %v355, %v354
    %v365 = vpack.c.b16 %v357, %v356
    %374 = vmatpush.bf16.msra.mxu0 %v365
    %375 = vmatpush.bf16.msra.mxu0 %v364
    %376 = vmatpush.bf16.msra.mxu0 %v363
    %377 = vmatpush.bf16.msra.mxu0 %v362
    %378 = vmatpush.bf16.msra.mxu0 %v361
    %379 = vmatpush.bf16.msra.mxu0 %v360
    %380 = vmatpush.bf16.msra.mxu0 %v359
    %381 = vmatpush.bf16.msra.mxu0 %v358
    %382 = vmatmul.bf16.gmra.mxu0 %v305
    %v383 = vpop.f32.mrf.mxu0
    %v384 = vadd.f32 %v324, %v383
    %v385 = vpop.f32.mrf.mxu0
    %386 = vdwg.mxu0
    %v387 = vpack.c.bf16 %v384, %v384
    %388 = vst [vmem:[#allocation10] sm:$0xf] %v387
    // Predicated region
    $region62: #{tpu_custom_call.1} parent=1 // pred_check
      _
    $region63: #{tpu_custom_call.1} parent=1 // pred_check_branch
      %390 = sbr.rel (0) target = $region65
    $region64: #{tpu_custom_call.1} parent=1 // pred_region
      %392 = vsyncadd [#allocation4], 0
      %s394 = sshll.u32 [#allocation10], 4
      %s395 = int_to_ptr.vmem [resolvable:$true] %s394
      %s396 = sshll.u32 %s11, 4
      %s397 = int_to_ptr.hbm [resolvable:$true] %s396
      %399 = dma.vmem_to_hbm [thread:$0]  %s395, 64, %s397, [#allocation4]
    $region65: #{tpu_custom_call.1} parent=1 // pred_fallthru
      _
    // Predicated region
    $region66: #{tpu_custom_call.1} parent=1 // pred_check
      _
    $region67: #{tpu_custom_call.1} parent=1 // pred_check_branch
      %401 = sbr.rel (0) target = $region69
    $region68: #{tpu_custom_call.1} parent=1 // pred_region
      %403 = dma.done [#allocation4], 64
    $region69: #{tpu_custom_call.1} parent=1 // pred_fallthru
      _
    %404 = vsyncpa [#allocation3], 1
    %405 = vsyncpa [#allocation6], 1
    %406 = vsyncpa [#allocation9], 1
    %407 = vsyncpa [#allocation4], 1

</llo_original>
